<compile_context>
chip_gen: v6e
topology: v6e:2x2x1
jax: 0.10.0
libtpu: 0.0.40
codegen_flags: <defaults>
</compile_context>

<pallas_src>
import functools

import jax
import jax.numpy as jnp
from jax.experimental import pallas as pl
from jax.experimental.pallas import tpu as pltpu

_LANES = 128      # vreg lane width / minor tile dim
_SUBLANES = 8     # vreg sublane count / second-minor tile dim


def _round_up(x: int, m: int) -> int:
    return (x + m - 1) // m * m


def _pack_params(w1, b1, w2, b2):
    """Pack (w1, b1, w2, b2) into one lane-dense f32 slab of shape (rows, 128).

    Row layout (all lane-padded with zeros out to 128 lanes):
      [0, F)               : w1  (F, H)
      [F]                  : b1  (H,)
      [row_w2, row_w2+128) : w2 zero-padded to (128, 128) (only first H rows used)
      [row_b2]             : b2  (C,)
    Zero padding is exact: padded contraction rows/lanes contribute +0.0, and
    b1's padded lanes keep the padded hidden lanes at relu(0) == 0.
    """
    F, H = w1.shape
    C = w2.shape[1]
    row_b1 = F
    row_w2 = _round_up(F + 1, _SUBLANES)          # sublane-aligned start for w2
    row_b2 = row_w2 + _LANES
    n_rows = _round_up(row_b2 + 1, _SUBLANES)

    p = jnp.zeros((n_rows, _LANES), jnp.float32)
    p = p.at[0:F, 0:H].set(w1.astype(jnp.float32))
    p = p.at[row_b1, 0:H].set(b1.reshape(H).astype(jnp.float32))
    p = p.at[row_w2:row_w2 + H, 0:C].set(w2.astype(jnp.float32))
    p = p.at[row_b2, 0:C].set(b2.reshape(C).astype(jnp.float32))
    return p, row_b1, row_w2, row_b2, n_rows


def _mlp_kernel(x_ref, p_ref, o_ref, *, n_features, row_b1, row_w2, row_b2):
    F = n_features
    x = x_ref[...]                            # (tile_b, F)
    w1 = p_ref[0:F, :]                        # (F, 128)   lanes >= H are zero
    b1 = p_ref[row_b1:row_b1 + 1, :]          # (1, 128)
    w2 = p_ref[row_w2:row_w2 + _LANES, :]     # (128, 128) rows >= H / lanes >= C are zero
    b2 = p_ref[row_b2:row_b2 + 1, :]          # (1, 128)

    # Hidden layer: (tile_b, F) @ (F, 128) + (1, 128) -> ReLU.
    h = jnp.dot(x, w1, preferred_element_type=jnp.float32) + b1
    h = jnp.maximum(h, 0.0)
    # Output layer on a lane-dense 128-wide slab; zero-padded rows of w2
    # contribute exactly 0, so this equals h[:, :H] @ w2 + b2.
    out = jnp.dot(h, w2, preferred_element_type=jnp.float32) + b2
    o_ref[...] = out.astype(o_ref.dtype)


def penguin_classifier(features, w1, b1, w2, b2, *, max_tile_b=1024):
    """features: (B, F) f32; w1: (F, 8); b1: (1, 8); w2: (8, C); b2: (1, C)."""
    B, F = features.shape
    C = w2.shape[1]

    params, row_b1, row_w2, row_b2, n_rows = _pack_params(w1, b1, w2, b2)

    # Batch tiling: big row tiles when B is large, a single sublane-rounded
    # tile otherwise.
    tile_b = min(max_tile_b, _round_up(B, _SUBLANES))
    b_pad = _round_up(B, tile_b)
    if b_pad != B:
        features = jnp.pad(features, ((0, b_pad - B), (0, 0)))
    grid = (b_pad // tile_b,)

    kernel = functools.partial(
        _mlp_kernel,
        n_features=F, row_b1=row_b1, row_w2=row_w2, row_b2=row_b2)

    out = pl.pallas_call(
        kernel,
        out_shape=jax.ShapeDtypeStruct((b_pad, _LANES), jnp.float32),
        grid=grid,
        in_specs=[
            pl.BlockSpec((tile_b, F), lambda i: (i, 0)),       # streamed activations
            pl.BlockSpec((n_rows, _LANES), lambda i: (0, 0)),  # resident packed params
        ],
        out_specs=pl.BlockSpec((tile_b, _LANES), lambda i: (i, 0)),  # lane-dense store
        compiler_params=pltpu.CompilerParams(
            dimension_semantics=("parallel",)),
    )(features, params)
    return out[:B, :C]


def init_params(key, n_features, n_classes, hidden=8):
    """Deterministic init matching PyTorch nn.Linear default (U(-1/sqrt(fan_in), +))."""
    k1, k2, k3, k4 = jax.random.split(key, 4)
    bound1 = 1.0 / jnp.sqrt(jnp.float32(n_features))
    bound2 = 1.0 / jnp.sqrt(jnp.float32(hidden))
    # Stored as (in, out): transpose of PyTorch's (out, in) weight layout.
    w1 = jax.random.uniform(k1, (n_features, hidden), jnp.float32, -bound1, bound1)
    b1 = jax.random.uniform(k2, (1, hidden), jnp.float32, -bound1, bound1)
    w2 = jax.random.uniform(k3, (hidden, n_classes), jnp.float32, -bound2, bound2)
    b2 = jax.random.uniform(k4, (1, n_classes), jnp.float32, -bound2, bound2)
    return w1, b1, w2, b2


if __name__ == "__main__":
    # Penguin dataset: 4 features, 3 species classes.  Batch 512 with a
    # 256-row tile exercises a 2-step streamed grid while keeping the data
    # tiny (8 KiB of input).
    n_features, n_classes, batch = 4, 3, 512

    key = jax.random.PRNGKey(0)
    k_params, k_x = jax.random.split(key)
    w1, b1, w2, b2 = init_params(k_params, n_features, n_classes)
    x = jax.random.normal(k_x, (batch, n_features), jnp.float32)

    logits = penguin_classifier(x, w1, b1, w2, b2, max_tile_b=256)
    logits = jax.block_until_ready(logits)

    # Reference check in plain JAX (same semantics as the PyTorch forward).
    ref = jnp.maximum(x @ w1 + b1, 0.0) @ w2 + b2
    assert logits.shape == (batch, n_classes)
    assert jnp.allclose(logits, ref, atol=1e-5, rtol=1e-5)

    print("KERNEL_OK")
</pallas_src>

<mosaic_0001>
module attributes {stable_mosaic.version = 11 : i64} {
  func.func @_mlp_kernel(%arg0: i32, %arg1: memref<256x4xf32, #tpu.memory_space<vmem>>, %arg2: memref<144x128xf32, #tpu.memory_space<vmem>>, %arg3: memref<256x128xf32, #tpu.memory_space<vmem>>) attributes {dimension_semantics = [#tpu.dimension_semantics<parallel>], iteration_bounds = array<i64: 2>, scalar_prefetch = 0 : i64, scratch_operands = 0 : i64, tpu.core_type = #tpu.core_type<tc>, window_params = [{transform_indices = @transform_0, window_bounds = array<i64: 256, 4>}, {pipeline_mode = #tpu.pipeline_mode<synchronous>, transform_indices = @transform_1, window_bounds = array<i64: 144, 128>}, {transform_indices = @transform_2, window_bounds = array<i64: 256, 128>}]} {
    %c0 = arith.constant 0 : index
    %c0_0 = arith.constant 0 : index
    %0 = vector.load %arg1[%c0, %c0_0] : memref<256x4xf32, #tpu.memory_space<vmem>>, vector<256x4xf32>
    %c0_1 = arith.constant 0 : index
    %c0_2 = arith.constant 0 : index
    %1 = vector.load %arg2[%c0_1, %c0_2] : memref<144x128xf32, #tpu.memory_space<vmem>>, vector<4x128xf32>
    %c4 = arith.constant 4 : index
    %c0_3 = arith.constant 0 : index
    %2 = vector.load %arg2[%c4, %c0_3] : memref<144x128xf32, #tpu.memory_space<vmem>>, vector<1x128xf32>
    %c8 = arith.constant 8 : index
    %c0_4 = arith.constant 0 : index
    %3 = vector.load %arg2[%c8, %c0_4] : memref<144x128xf32, #tpu.memory_space<vmem>>, vector<128x128xf32>
    %c136 = arith.constant 136 : index
    %c0_5 = arith.constant 0 : index
    %4 = vector.load %arg2[%c136, %c0_5] : memref<144x128xf32, #tpu.memory_space<vmem>>, vector<1x128xf32>
    %cst = arith.constant dense<0.000000e+00> : vector<256x128xf32>
    %5 = tpu.matmul %0, %1, %cst {dimension_numbers = #tpu.dot_dimension_numbers<[1], [0], [0], [1], [0, 0, 1, 1], [], []>} : vector<256x4xf32>, vector<4x128xf32>, vector<256x128xf32> -> vector<256x128xf32>
    %6 = vector.broadcast %2 : vector<1x128xf32> to vector<256x128xf32>
    %7 = arith.addf %5, %6 : vector<256x128xf32>
    %cst_6 = arith.constant 0.000000e+00 : f32
    %8 = vector.broadcast %cst_6 : f32 to vector<256x128xf32>
    %9 = arith.maximumf %7, %8 : vector<256x128xf32>
    %cst_7 = arith.constant dense<0.000000e+00> : vector<256x128xf32>
    %10 = tpu.matmul %9, %3, %cst_7 {dimension_numbers = #tpu.dot_dimension_numbers<[1], [0], [0], [1], [0, 0, 1, 1], [], []>} : vector<256x128xf32>, vector<128x128xf32>, vector<256x128xf32> -> vector<256x128xf32>
    %11 = vector.broadcast %4 : vector<1x128xf32> to vector<256x128xf32>
    %12 = arith.addf %10, %11 : vector<256x128xf32>
    %c0_8 = arith.constant 0 : index
    %c0_9 = arith.constant 0 : index
    %13 = vector.load %arg3[%c0_8, %c0_9] : memref<256x128xf32, #tpu.memory_space<vmem>>, vector<256x128xf32>
    tpu.vector_store %arg3[%c0_8, %c0_9], %12 {strides = array<i32>} : memref<256x128xf32, #tpu.memory_space<vmem>>, vector<256x128xf32>,
    return
  }
  func.func @transform_0(%arg0: i32) -> (i32, i32) {
    %c0_i32 = arith.constant 0 : i32
    %c0_i32_0 = arith.constant 0 : i32
    return %arg0, %c0_i32 : i32, i32
  }
  func.func @transform_1(%arg0: i32) -> (i32, i32) {
    %c0_i32 = arith.constant 0 : i32
    %c0_i32_0 = arith.constant 0 : i32
    %c0_i32_1 = arith.constant 0 : i32
    return %c0_i32, %c0_i32_0 : i32, i32
  }
  func.func @transform_2(%arg0: i32) -> (i32, i32) {
    %c0_i32 = arith.constant 0 : i32
    %c0_i32_0 = arith.constant 0 : i32
    return %arg0, %c0_i32 : i32, i32
  }
}

</mosaic_0001>

<llo_original>
// kernel: tpu_custom_call.1
$region0: #{tpu_custom_call.1}
  #allocation0 [shape = 'u32[]', space=smem, size = 0x4, offset = 0x4, fixed_abs, tag = 'smem constant byte address 0x4 - core index']
  #allocation1 [shape = 'u32[144,128]{1,0:T(1,128)}', space=vmem, size = 0x12000, scoped, tag = 'internal scratch']
  %s0 = inlined_call_operand.vmem [shape: f32[512,4], index: 0, kind: input, shape index: {}]
  %s1 = inlined_call_operand.vmem [shape: f32[144,128], index: 1, kind: input, shape index: {}]
  %s2 = inlined_call_operand.hbm [shape: f32[512,128], index: 2, kind: output, shape index: {}]
  %s3 = sld [smem:[#allocation0]]
  $region41: #{tpu_custom_call.1} parent=0
    _
  %s5 = ssub.s32 1, %s3
  %s6 = scalar_select 0, %s5, %s3
  $region1: #{tpu_custom_call.1} parent=0
    #allocation2 [shape = 'u8[262144]{0}', space=vmem, size = 0x40000, scoped, tag = 'output window, operand 0']
    #allocation3 [shape = 's32[2]{0}', space=sflag, size = 0x8, scoped, tag = 'scoped memory for tpu_custom_call.1']
    %7 = vsyncpa [#allocation3], 0
    %s8 = scalar_lea.sflag [#allocation3], 1
    %9 = vsyncpa %s8, 0
    loop: start=0, step=1, limit=4
    $region2: #{tpu_custom_call.1} parent=1 // loop_pre_header
      _
    $region3: #{tpu_custom_call.1} parent=1 // loop_header
      %s11 = sphi 0, %s15
      %p12 = scmp.ge.s32.totalorder %s11, 4
      %s21 = sphi 0, %s23
      %s24 = sphi 0, %s21
      %s25 = sphi 0, %s24
      %s41 = sphi 0, %s25
      %s45 = sphi 0, %s45
      %s47 = sphi 0, %s45
      %s48 = sphi 0, %s47
      %s62 = sphi 0, %s48
      %s68 = sphi 0, %s70
      %s71 = sphi 0, %s68
      %s72 = sphi 0, %s71
      %s88 = sphi 0, %s72
    $region4: #{tpu_custom_call.1} parent=1 // loop_header_branch
      %14 = sbr.rel (%p12) target = $region8
    $region5: #{tpu_custom_call.1} parent=1 // loop_body
      %s16 = ssub.s32 %s11, 1
      %s17 = ssub.s32 %s11, 2
      %s18 = sadd.s32 %s11, 1
      %s19 = ssub.s32 %s11, %s18
      %p20 = scmp.eq.s32.totalorder %s19, 0
      %s22 = sadd.s32 %s21, 1
      %s23 = scalar_select %p20, %s21, %s22
      %p26 = pneg %p20
      %p27 = scmp.eq.s32.totalorder %s11, 1
      %p28 = por %p26, %p27
      %p29 = scmp.ne.s32.totalorder %s21, %s24
      %p30 = scmp.eq.s32.totalorder %s11, 0
      %p31 = por %p29, %p30
      %p32 = scmp.ne.s32.totalorder %s21, %s24
      %p33 = scmp.eq.s32.totalorder %s16, 1
      %p34 = por %p32, %p33
      %p35 = scmp.ne.s32.totalorder %s24, %s25
      %p36 = scmp.eq.s32.totalorder %s16, 0
      %p37 = por %p35, %p36
      %p38 = scmp.ne.s32.totalorder %s24, %s25
      %p39 = scmp.eq.s32.totalorder %s17, 1
      %p40 = por %p38, %p39
      %p42 = scmp.ne.s32.totalorder %s25, %s41
      %p43 = scmp.eq.s32.totalorder %s17, 0
      %p44 = por %p42, %p43
      %s46 = sadd.s32 %s45, 1
      %p49 = scmp.eq.s32.totalorder %s11, 1
      %p50 = scmp.ne.s32.totalorder %s45, %s47
      %p51 = scmp.eq.s32.totalorder %s11, 0
      %p52 = por %p50, %p51
      %p53 = scmp.ne.s32.totalorder %s45, %s47
      %p54 = scmp.eq.s32.totalorder %s16, 1
      %p55 = por %p53, %p54
      %p56 = scmp.ne.s32.totalorder %s47, %s48
      %p57 = scmp.eq.s32.totalorder %s16, 0
      %p58 = por %p56, %p57
      %p59 = scmp.ne.s32.totalorder %s47, %s48
      %p60 = scmp.eq.s32.totalorder %s17, 1
      %p61 = por %p59, %p60
      %p63 = scmp.ne.s32.totalorder %s48, %s62
      %p64 = scmp.eq.s32.totalorder %s17, 0
      %p65 = por %p63, %p64
      %s66 = ssub.s32 %s11, %s18
      %p67 = scmp.eq.s32.totalorder %s66, 0
      %s69 = sadd.s32 %s68, 1
      %s70 = scalar_select %p67, %s68, %s69
      %p73 = pneg %p67
      %p74 = scmp.eq.s32.totalorder %s11, 1
      %p75 = por %p73, %p74
      %p76 = scmp.ne.s32.totalorder %s68, %s71
      %p77 = scmp.eq.s32.totalorder %s11, 0
      %p78 = por %p76, %p77
      %p79 = scmp.ne.s32.totalorder %s68, %s71
      %p80 = scmp.eq.s32.totalorder %s16, 1
      %p81 = por %p79, %p80
      %p82 = scmp.ne.s32.totalorder %s71, %s72
      %p83 = scmp.eq.s32.totalorder %s16, 0
      %p84 = por %p82, %p83
      %p85 = scmp.ne.s32.totalorder %s71, %s72
      %p86 = scmp.eq.s32.totalorder %s17, 1
      %p87 = por %p85, %p86
      %p89 = scmp.ne.s32.totalorder %s72, %s88
      %p90 = scmp.eq.s32.totalorder %s17, 0
      %p91 = por %p89, %p90
      %p92 = scmp.le.s32.totalorder 1, %s11
      %p93 = scmp.lt.s32.totalorder %s11, 3
      %p94 = pnand %p92, %p93
      %p95 = pneg %p94
      // Predicated region
      $region9: #{tpu_custom_call.1} parent=5 // pred_check
        _
      $region10: #{tpu_custom_call.1} parent=5 // pred_check_branch
        %97 = sbr.rel (%p94) target = $region12
      $region11: #{tpu_custom_call.1} parent=5 // pred_region
        %s98 = ssub.s32 %s11, 1
        // Predicated region
        $region13: #{tpu_custom_call.1} parent=11 // pred_check
          %p99 = pneg %p58
        $region14: #{tpu_custom_call.1} parent=11 // pred_check_branch
          %101 = sbr.rel (%p99) target = $region16
        $region15: #{tpu_custom_call.1} parent=11 // pred_region
          _
        $region16: #{tpu_custom_call.1} parent=11 // pred_fallthru
          _
      $region12: #{tpu_custom_call.1} parent=5 // pred_fallthru
        _
      %p102 = scmp.lt.s32.totalorder %s11, 2
      // Predicated region
      $region17: #{tpu_custom_call.1} parent=5 // pred_check
        %p103 = pneg %p102
      $region18: #{tpu_custom_call.1} parent=5 // pred_check_branch
        %105 = sbr.rel (%p103) target = $region20
      $region19: #{tpu_custom_call.1} parent=5 // pred_region
        // Predicated region
        $region21: #{tpu_custom_call.1} parent=19 // pred_check
          %p106 = pneg %p31
        $region22: #{tpu_custom_call.1} parent=19 // pred_check_branch
          %108 = sbr.rel (%p106) target = $region24
        $region23: #{tpu_custom_call.1} parent=19 // pred_region
          %s109 = smul.u32 32, %s11
          %p110 = scmp.lt.s32.totalorder %s109, 63
          %s111 = scalar_select %p110, %s109, 63
          %s112 = smul.addr %s111, 8
          %s113 = scalar_lea.vmem %s0, %s112
          %s114 = smul.u32 32, %s11
        $region24: #{tpu_custom_call.1} parent=19 // pred_fallthru
          _
      $region20: #{tpu_custom_call.1} parent=5 // pred_fallthru
        _
      %p115 = scmp.le.s32.totalorder 1, %s11
      %p116 = scmp.lt.s32.totalorder %s11, 3
      %p117 = pnand %p115, %p116
      %p118 = pneg %p117
      // Predicated region
      $region25: #{tpu_custom_call.1} parent=5 // pred_check
        _
      $region26: #{tpu_custom_call.1} parent=5 // pred_check_branch
        %120 = sbr.rel (%p117) target = $region28
      $region27: #{tpu_custom_call.1} parent=5 // pred_region
        %s121 = ssub.s32 %s11, 1
        %s122 = smul.u32 32, %s16
        %p123 = scmp.lt.s32.totalorder %s122, 63
        %s124 = scalar_select %p123, %s122, 63
        %s125 = smul.addr %s124, 8
        %s126 = scalar_lea.vmem %s0, %s125
        %p127 = pneg %p37
        %p128 = pneg %p34
        %p129 = pneg %p58
        %p130 = pneg %p55
        %p131 = pneg %p84
        %p132 = pneg %p81
        %s133 = sand.u32 %s71, 1
        %s134 = scalar_lea.sflag [#allocation3], %s133
        %s135 = sand.u32 %s71, 1
        %s136 = smul.addr %s135, 256
        %s137 = scalar_lea.vmem [#allocation2], %s136
        %s138 = smul.u32 32, %s16
        %p139 = scmp.lt.s32.totalorder %s138, 63
        %s140 = scalar_select %p139, %s138, 63
        %s141 = smul.addr %s140, 8
        %s142 = scalar_lea.vmem %s0, %s141
        %s143 = smul.u32 32, %s16
        %s144 = smul.u32 32, %s16
        %v145 = vld [vmem:[%s142] sm:$0xff]
        %v146 = vld [vmem:[%s142 + $0x8] sm:$0xff]
        %v147 = vld [vmem:[%s142 + $0x10] sm:$0xff]
        %v148 = vld [vmem:[%s142 + $0x18] sm:$0xff]
        %v149 = vld [vmem:[%s142 + $0x20] sm:$0xff]
        %v150 = vld [vmem:[%s142 + $0x28] sm:$0xff]
        %v151 = vld [vmem:[%s142 + $0x30] sm:$0xff]
        %v152 = vld [vmem:[%s142 + $0x38] sm:$0xff]
        %v153 = vld [vmem:[%s142 + $0x40] sm:$0xff]
        %v154 = vld [vmem:[%s142 + $0x48] sm:$0xff]
        %v155 = vld [vmem:[%s142 + $0x50] sm:$0xff]
        %v156 = vld [vmem:[%s142 + $0x58] sm:$0xff]
        %v157 = vld [vmem:[%s142 + $0x60] sm:$0xff]
        %v158 = vld [vmem:[%s142 + $0x68] sm:$0xff]
        %v159 = vld [vmem:[%s142 + $0x70] sm:$0xff]
        %v160 = vld [vmem:[%s142 + $0x78] sm:$0xff]
        %v161 = vld [vmem:[%s142 + $0x80] sm:$0xff]
        %v162 = vld [vmem:[%s142 + $0x88] sm:$0xff]
        %v163 = vld [vmem:[%s142 + $0x90] sm:$0xff]
        %v164 = vld [vmem:[%s142 + $0x98] sm:$0xff]
        %v165 = vld [vmem:[%s142 + $0xa0] sm:$0xff]
        %v166 = vld [vmem:[%s142 + $0xa8] sm:$0xff]
        %v167 = vld [vmem:[%s142 + $0xb0] sm:$0xff]
        %v168 = vld [vmem:[%s142 + $0xb8] sm:$0xff]
        %v169 = vld [vmem:[%s142 + $0xc0] sm:$0xff]
        %v170 = vld [vmem:[%s142 + $0xc8] sm:$0xff]
        %v171 = vld [vmem:[%s142 + $0xd0] sm:$0xff]
        %v172 = vld [vmem:[%s142 + $0xd8] sm:$0xff]
        %v173 = vld [vmem:[%s142 + $0xe0] sm:$0xff]
        %v174 = vld [vmem:[%s142 + $0xe8] sm:$0xff]
        %v175 = vld [vmem:[%s142 + $0xf0] sm:$0xff]
        %v176 = vld [vmem:[%s142 + $0xf8] sm:$0xff]
        %v177 = vld [vmem:[%s1] sm:$0xf]
        %v178 = vld [vmem:[%s1 + $0x4] sm:$0x1]
        %v179 = vld [vmem:[%s1 + $0x8] sm:$0xff]
        %v180 = vld [vmem:[%s1 + $0x10] sm:$0xff]
        %v181 = vld [vmem:[%s1 + $0x18] sm:$0xff]
        %v182 = vld [vmem:[%s1 + $0x20] sm:$0xff]
        %v183 = vld [vmem:[%s1 + $0x28] sm:$0xff]
        %v184 = vld [vmem:[%s1 + $0x30] sm:$0xff]
        %v185 = vld [vmem:[%s1 + $0x38] sm:$0xff]
        %v186 = vld [vmem:[%s1 + $0x40] sm:$0xff]
        %v187 = vld [vmem:[%s1 + $0x48] sm:$0xff]
        %v188 = vld [vmem:[%s1 + $0x50] sm:$0xff]
        %v189 = vld [vmem:[%s1 + $0x58] sm:$0xff]
        %v190 = vld [vmem:[%s1 + $0x60] sm:$0xff]
        %v191 = vld [vmem:[%s1 + $0x68] sm:$0xff]
        %v192 = vld [vmem:[%s1 + $0x70] sm:$0xff]
        %v193 = vld [vmem:[%s1 + $0x78] sm:$0xff]
        %v194 = vld [vmem:[%s1 + $0x80] sm:$0xff]
        %v195 = vld [vmem:[%s1 + $0x88] sm:$0x1]
        %v196 = vlaneseq
        %v197 = vshrl.u32 %v196, 7
        %v198 = vsub.s32 0, %v197
        %v199 = vrot.slane %v178, %v198
        %vm200 = vcmask 31744
        %v202 = vsel %vm200, %v145, 0
        %v205 = vsel %vm200, %v146, 0
        %v208 = vsel %vm200, %v147, 0
        %v211 = vsel %vm200, %v148, 0
        %v214 = vsel %vm200, %v149, 0
        %v217 = vsel %vm200, %v150, 0
        %v220 = vsel %vm200, %v151, 0
        %v223 = vsel %vm200, %v152, 0
        %v226 = vsel %vm200, %v153, 0
        %v229 = vsel %vm200, %v154, 0
        %v232 = vsel %vm200, %v155, 0
        %v235 = vsel %vm200, %v156, 0
        %v238 = vsel %vm200, %v157, 0
        %v241 = vsel %vm200, %v158, 0
        %v244 = vsel %vm200, %v159, 0
        %v247 = vsel %vm200, %v160, 0
        %v250 = vsel %vm200, %v161, 0
        %v253 = vsel %vm200, %v162, 0
        %v256 = vsel %vm200, %v163, 0
        %v259 = vsel %vm200, %v164, 0
        %v262 = vsel %vm200, %v165, 0
        %v265 = vsel %vm200, %v166, 0
        %v268 = vsel %vm200, %v167, 0
        %v271 = vsel %vm200, %v168, 0
        %v274 = vsel %vm200, %v169, 0
        %v277 = vsel %vm200, %v170, 0
        %v280 = vsel %vm200, %v171, 0
        %v283 = vsel %vm200, %v172, 0
        %v286 = vsel %vm200, %v173, 0
        %v289 = vsel %vm200, %v174, 0
        %v292 = vsel %vm200, %v175, 0
        %v295 = vsel %vm200, %v176, 0
        %vm297 = vcmask 1043456
        %v299 = vsel %vm297, %v177, 0
        %301 = vmatprep.subr.mxu0 0.0
        %302 = vmatpush1.msra.mxu0 0.0
        %303 = vmatprep.subr.mxu0 0.0
        %304 = vmatpush1.msra.mxu0 0.0
        %305 = vmatprep.subr.mxu0 0.0
        %306 = vmatpush1.msra.mxu0 0.0
        %307 = vmatprep.subr.mxu0 0.0
        %308 = vmatpush1.msra.mxu0 0.0
        %309 = vmatprep.subr.mxu0 0.0
        %310 = vmatpush1.msra.mxu0 0.0
        %311 = vmatprep.subr.mxu0 0.0
        %312 = vmatpush1.msra.mxu0 0.0
        %313 = vmatprep.subr.mxu0 0.0
        %314 = vmatpush1.msra.mxu0 0.0
        %315 = vmatprep.subr.mxu0 0.0
        %316 = vmatpush1.msra.mxu0 0.0
        %317 = vmatprep.subr.mxu0 0.0
        %318 = vmatpush1.msra.mxu0 0.0
        %319 = vmatprep.subr.mxu0 0.0
        %320 = vmatpush1.msra.mxu0 0.0
        %321 = vmatprep.subr.mxu0 0.0
        %322 = vmatpush1.msra.mxu0 0.0
        %323 = vmatprep.subr.mxu0 0.0
        %324 = vmatpush1.msra.mxu0 0.0
        %325 = vmatprep.subr.mxu0 0.0
        %326 = vmatpush1.msra.mxu0 0.0
        %327 = vmatprep.subr.mxu0 0.0
        %328 = vmatpush1.msra.mxu0 0.0
        %329 = vmatprep.subr.mxu0 0.0
        %330 = vmatpush1.msra.mxu0 0.0
        %331 = vmatprep.subr.mxu0 0.0
        %332 = vmatpush1.msra.mxu0 %v299
        %333 = vmatprep.subr.mxu0 0.0
        %334 = vmatpush2.msra.mxu0 0.0
        %335 = vmatprep.subr.mxu0 0.0
        %336 = vmatpush2.msra.mxu0 0.0
        %337 = vmatprep.subr.mxu0 0.0
        %338 = vmatpush2.msra.mxu0 0.0
        %339 = vmatprep.subr.mxu0 0.0
        %340 = vmatpush2.msra.mxu0 0.0
        %341 = vmatprep.subr.mxu0 0.0
        %342 = vmatpush2.msra.mxu0 0.0
        %343 = vmatprep.subr.mxu0 0.0
        %344 = vmatpush2.msra.mxu0 0.0
        %345 = vmatprep.subr.mxu0 0.0
        %346 = vmatpush2.msra.mxu0 0.0
        %347 = vmatprep.subr.mxu0 0.0
        %348 = vmatpush2.msra.mxu0 0.0
        %349 = vmatprep.subr.mxu0 0.0
        %350 = vmatpush2.msra.mxu0 0.0
        %351 = vmatprep.subr.mxu0 0.0
        %352 = vmatpush2.msra.mxu0 0.0
        %353 = vmatprep.subr.mxu0 0.0
        %354 = vmatpush2.msra.mxu0 0.0
        %355 = vmatprep.subr.mxu0 0.0
        %356 = vmatpush2.msra.mxu0 0.0
        %357 = vmatprep.subr.mxu0 0.0
        %358 = vmatpush2.msra.mxu0 0.0
        %359 = vmatprep.subr.mxu0 0.0
        %360 = vmatpush2.msra.mxu0 0.0
        %361 = vmatprep.subr.mxu0 0.0
        %362 = vmatpush2.msra.mxu0 0.0
        %363 = vmatprep.subr.mxu0 0.0
        %364 = vmatpush2.msra.mxu0 0.0
        %365 = vmatprep.mubr.f32.mxu0 0.0
        %366 = vmatmul.mubr.f32.gmra.mxu0 %v202
        %v367 = vpop.f32.mrf.mxu0
        %v368 = vadd.f32 %v199, %v367
        %v369 = vpop.f32.mrf.mxu0
        %370 = vmatprep.mubr.f32.mxu0 0.0
        %371 = vmatmul.mubr.f32.gmra.mxu0 %v205
        %v372 = vpop.f32.mrf.mxu0
        %v373 = vadd.f32 %v199, %v372
        %v374 = vpop.f32.mrf.mxu0
        %375 = vmatprep.mubr.f32.mxu0 0.0
        %376 = vmatmul.mubr.f32.gmra.mxu0 %v208
        %v377 = vpop.f32.mrf.mxu0
        %v378 = vadd.f32 %v199, %v377
        %v379 = vpop.f32.mrf.mxu0
        %380 = vmatprep.mubr.f32.mxu0 0.0
        %381 = vmatmul.mubr.f32.gmra.mxu0 %v211
        %v382 = vpop.f32.mrf.mxu0
        %v383 = vadd.f32 %v199, %v382
        %v384 = vpop.f32.mrf.mxu0
        %385 = vmatprep.mubr.f32.mxu0 0.0
        %386 = vmatmul.mubr.f32.gmra.mxu0 %v214
        %v387 = vpop.f32.mrf.mxu0
        %v388 = vadd.f32 %v199, %v387
        %v389 = vpop.f32.mrf.mxu0
        %390 = vmatprep.mubr.f32.mxu0 0.0
        %391 = vmatmul.mubr.f32.gmra.mxu0 %v217
        %v392 = vpop.f32.mrf.mxu0
        %v393 = vadd.f32 %v199, %v392
        %v394 = vpop.f32.mrf.mxu0
        %395 = vmatprep.mubr.f32.mxu0 0.0
        %396 = vmatmul.mubr.f32.gmra.mxu0 %v220
        %v397 = vpop.f32.mrf.mxu0
        %v398 = vadd.f32 %v199, %v397
        %v399 = vpop.f32.mrf.mxu0
        %400 = vmatprep.mubr.f32.mxu0 0.0
        %401 = vmatmul.mubr.f32.gmra.mxu0 %v223
        %v402 = vpop.f32.mrf.mxu0
        %v403 = vadd.f32 %v199, %v402
        %v404 = vpop.f32.mrf.mxu0
        %405 = vmatprep.mubr.f32.mxu0 0.0
        %406 = vmatmul.mubr.f32.gmra.mxu0 %v226
        %v407 = vpop.f32.mrf.mxu0
        %v408 = vadd.f32 %v199, %v407
        %v409 = vpop.f32.mrf.mxu0
        %410 = vmatprep.mubr.f32.mxu0 0.0
        %411 = vmatmul.mubr.f32.gmra.mxu0 %v229
        %v412 = vpop.f32.mrf.mxu0
        %v413 = vadd.f32 %v199, %v412
        %v414 = vpop.f32.mrf.mxu0
        %415 = vmatprep.mubr.f32.mxu0 0.0
        %416 = vmatmul.mubr.f32.gmra.mxu0 %v232
        %v417 = vpop.f32.mrf.mxu0
        %v418 = vadd.f32 %v199, %v417
        %v419 = vpop.f32.mrf.mxu0
        %420 = vmatprep.mubr.f32.mxu0 0.0
        %421 = vmatmul.mubr.f32.gmra.mxu0 %v235
        %v422 = vpop.f32.mrf.mxu0
        %v423 = vadd.f32 %v199, %v422
        %v424 = vpop.f32.mrf.mxu0
        %425 = vmatprep.mubr.f32.mxu0 0.0
        %426 = vmatmul.mubr.f32.gmra.mxu0 %v238
        %v427 = vpop.f32.mrf.mxu0
        %v428 = vadd.f32 %v199, %v427
        %v429 = vpop.f32.mrf.mxu0
        %430 = vmatprep.mubr.f32.mxu0 0.0
        %431 = vmatmul.mubr.f32.gmra.mxu0 %v241
        %v432 = vpop.f32.mrf.mxu0
        %v433 = vadd.f32 %v199, %v432
        %v434 = vpop.f32.mrf.mxu0
        %435 = vmatprep.mubr.f32.mxu0 0.0
        %436 = vmatmul.mubr.f32.gmra.mxu0 %v244
        %v437 = vpop.f32.mrf.mxu0
        %v438 = vadd.f32 %v199, %v437
        %v439 = vpop.f32.mrf.mxu0
        %440 = vmatprep.mubr.f32.mxu0 0.0
        %441 = vmatmul.mubr.f32.gmra.mxu0 %v247
        %v442 = vpop.f32.mrf.mxu0
        %v443 = vadd.f32 %v199, %v442
        %v444 = vpop.f32.mrf.mxu0
        %445 = vmatprep.mubr.f32.mxu0 0.0
        %446 = vmatmul.mubr.f32.gmra.mxu0 %v250
        %v447 = vpop.f32.mrf.mxu0
        %v448 = vadd.f32 %v199, %v447
        %v449 = vpop.f32.mrf.mxu0
        %450 = vmatprep.mubr.f32.mxu0 0.0
        %451 = vmatmul.mubr.f32.gmra.mxu0 %v253
        %v452 = vpop.f32.mrf.mxu0
        %v453 = vadd.f32 %v199, %v452
        %v454 = vpop.f32.mrf.mxu0
        %455 = vmatprep.mubr.f32.mxu0 0.0
        %456 = vmatmul.mubr.f32.gmra.mxu0 %v256
        %v457 = vpop.f32.mrf.mxu0
        %v458 = vadd.f32 %v199, %v457
        %v459 = vpop.f32.mrf.mxu0
        %460 = vmatprep.mubr.f32.mxu0 0.0
        %461 = vmatmul.mubr.f32.gmra.mxu0 %v259
        %v462 = vpop.f32.mrf.mxu0
        %v463 = vadd.f32 %v199, %v462
        %v464 = vpop.f32.mrf.mxu0
        %465 = vmatprep.mubr.f32.mxu0 0.0
        %466 = vmatmul.mubr.f32.gmra.mxu0 %v262
        %v467 = vpop.f32.mrf.mxu0
        %v468 = vadd.f32 %v199, %v467
        %v469 = vpop.f32.mrf.mxu0
        %470 = vmatprep.mubr.f32.mxu0 0.0
        %471 = vmatmul.mubr.f32.gmra.mxu0 %v265
        %v472 = vpop.f32.mrf.mxu0
        %v473 = vadd.f32 %v199, %v472
        %v474 = vpop.f32.mrf.mxu0
        %475 = vmatprep.mubr.f32.mxu0 0.0
        %476 = vmatmul.mubr.f32.gmra.mxu0 %v268
        %v477 = vpop.f32.mrf.mxu0
        %v478 = vadd.f32 %v199, %v477
        %v479 = vpop.f32.mrf.mxu0
        %480 = vmatprep.mubr.f32.mxu0 0.0
        %481 = vmatmul.mubr.f32.gmra.mxu0 %v271
        %v482 = vpop.f32.mrf.mxu0
        %v483 = vadd.f32 %v199, %v482
        %v484 = vpop.f32.mrf.mxu0
        %485 = vmatprep.mubr.f32.mxu0 0.0
        %486 = vmatmul.mubr.f32.gmra.mxu0 %v274
        %v487 = vpop.f32.mrf.mxu0
        %v488 = vadd.f32 %v199, %v487
        %v489 = vpop.f32.mrf.mxu0
        %490 = vmatprep.mubr.f32.mxu0 0.0
        %491 = vmatmul.mubr.f32.gmra.mxu0 %v277
        %v492 = vpop.f32.mrf.mxu0
        %v493 = vadd.f32 %v199, %v492
        %v494 = vpop.f32.mrf.mxu0
        %495 = vmatprep.mubr.f32.mxu0 0.0
        %496 = vmatmul.mubr.f32.gmra.mxu0 %v280
        %v497 = vpop.f32.mrf.mxu0
        %v498 = vadd.f32 %v199, %v497
        %v499 = vpop.f32.mrf.mxu0
        %500 = vmatprep.mubr.f32.mxu0 0.0
        %501 = vmatmul.mubr.f32.gmra.mxu0 %v283
        %v502 = vpop.f32.mrf.mxu0
        %v503 = vadd.f32 %v199, %v502
        %v504 = vpop.f32.mrf.mxu0
        %505 = vmatprep.mubr.f32.mxu0 0.0
        %506 = vmatmul.mubr.f32.gmra.mxu0 %v286
        %v507 = vpop.f32.mrf.mxu0
        %v508 = vadd.f32 %v199, %v507
        %v509 = vpop.f32.mrf.mxu0
        %510 = vmatprep.mubr.f32.mxu0 0.0
        %511 = vmatmul.mubr.f32.gmra.mxu0 %v289
        %v512 = vpop.f32.mrf.mxu0
        %v513 = vadd.f32 %v199, %v512
        %v514 = vpop.f32.mrf.mxu0
        %515 = vmatprep.mubr.f32.mxu0 0.0
        %516 = vmatmul.mubr.f32.gmra.mxu0 %v292
        %v517 = vpop.f32.mrf.mxu0
        %v518 = vadd.f32 %v199, %v517
        %v519 = vpop.f32.mrf.mxu0
        %520 = vmatprep.mubr.f32.mxu0 0.0
        %521 = vmatmul.mubr.f32.gmra.mxu0 %v295
        %v522 = vpop.f32.mrf.mxu0
        %v523 = vadd.f32 %v199, %v522
        %v524 = vpop.f32.mrf.mxu0
        %525 = vdwg.mxu0
        %v526 = vmax.f32 %v368, 0.0
        %v527 = vmax.f32 %v373, 0.0
        %v528 = vmax.f32 %v378, 0.0
        %v529 = vmax.f32 %v383, 0.0
        %v530 = vmax.f32 %v388, 0.0
        %v531 = vmax.f32 %v393, 0.0
        %v532 = vmax.f32 %v398, 0.0
        %v533 = vmax.f32 %v403, 0.0
        %v534 = vmax.f32 %v408, 0.0
        %v535 = vmax.f32 %v413, 0.0
        %v536 = vmax.f32 %v418, 0.0
        %v537 = vmax.f32 %v423, 0.0
        %v538 = vmax.f32 %v428, 0.0
        %v539 = vmax.f32 %v433, 0.0
        %v540 = vmax.f32 %v438, 0.0
        %v541 = vmax.f32 %v443, 0.0
        %v542 = vmax.f32 %v448, 0.0
        %v543 = vmax.f32 %v453, 0.0
        %v544 = vmax.f32 %v458, 0.0
        %v545 = vmax.f32 %v463, 0.0
        %v546 = vmax.f32 %v468, 0.0
        %v547 = vmax.f32 %v473, 0.0
        %v548 = vmax.f32 %v478, 0.0
        %v549 = vmax.f32 %v483, 0.0
        %v550 = vmax.f32 %v488, 0.0
        %v551 = vmax.f32 %v493, 0.0
        %v552 = vmax.f32 %v498, 0.0
        %v553 = vmax.f32 %v503, 0.0
        %v554 = vmax.f32 %v508, 0.0
        %v555 = vmax.f32 %v513, 0.0
        %v556 = vmax.f32 %v518, 0.0
        %v557 = vmax.f32 %v523, 0.0
        %v558 = vlaneseq
        %v559 = vshrl.u32 %v558, 7
        %v560 = vsub.s32 0, %v559
        %v561 = vrot.slane %v195, %v560
        %562 = vmatprep.subr.mxu0 0.0
        %563 = vmatpush1.msra.mxu0 %v194
        %564 = vmatprep.subr.mxu0 0.0
        %565 = vmatpush1.msra.mxu0 %v193
        %566 = vmatprep.subr.mxu0 0.0
        %567 = vmatpush1.msra.mxu0 %v192
        %568 = vmatprep.subr.mxu0 0.0
        %569 = vmatpush1.msra.mxu0 %v191
        %570 = vmatprep.subr.mxu0 0.0
        %571 = vmatpush1.msra.mxu0 %v190
        %572 = vmatprep.subr.mxu0 0.0
        %573 = vmatpush1.msra.mxu0 %v189
        %574 = vmatprep.subr.mxu0 0.0
        %575 = vmatpush1.msra.mxu0 %v188
        %576 = vmatprep.subr.mxu0 0.0
        %577 = vmatpush1.msra.mxu0 %v187
        %578 = vmatprep.subr.mxu0 0.0
        %579 = vmatpush1.msra.mxu0 %v186
        %580 = vmatprep.subr.mxu0 0.0
        %581 = vmatpush1.msra.mxu0 %v185
        %582 = vmatprep.subr.mxu0 0.0
        %583 = vmatpush1.msra.mxu0 %v184
        %584 = vmatprep.subr.mxu0 0.0
        %585 = vmatpush1.msra.mxu0 %v183
        %586 = vmatprep.subr.mxu0 0.0
        %587 = vmatpush1.msra.mxu0 %v182
        %588 = vmatprep.subr.mxu0 0.0
        %589 = vmatpush1.msra.mxu0 %v181
        %590 = vmatprep.subr.mxu0 0.0
        %591 = vmatpush1.msra.mxu0 %v180
        %592 = vmatprep.subr.mxu0 0.0
        %593 = vmatpush1.msra.mxu0 %v179
        %594 = vmatprep.subr.mxu0 0.0
        %595 = vmatpush2.msra.mxu0 0.0
        %596 = vmatprep.subr.mxu0 0.0
        %597 = vmatpush2.msra.mxu0 0.0
        %598 = vmatprep.subr.mxu0 0.0
        %599 = vmatpush2.msra.mxu0 0.0
        %600 = vmatprep.subr.mxu0 0.0
        %601 = vmatpush2.msra.mxu0 0.0
        %602 = vmatprep.subr.mxu0 0.0
        %603 = vmatpush2.msra.mxu0 0.0
        %604 = vmatprep.subr.mxu0 0.0
        %605 = vmatpush2.msra.mxu0 0.0
        %606 = vmatprep.subr.mxu0 0.0
        %607 = vmatpush2.msra.mxu0 0.0
        %608 = vmatprep.subr.mxu0 0.0
        %609 = vmatpush2.msra.mxu0 0.0
        %610 = vmatprep.subr.mxu0 0.0
        %611 = vmatpush2.msra.mxu0 0.0
        %612 = vmatprep.subr.mxu0 0.0
        %613 = vmatpush2.msra.mxu0 0.0
        %614 = vmatprep.subr.mxu0 0.0
        %615 = vmatpush2.msra.mxu0 0.0
        %616 = vmatprep.subr.mxu0 0.0
        %617 = vmatpush2.msra.mxu0 0.0
        %618 = vmatprep.subr.mxu0 0.0
        %619 = vmatpush2.msra.mxu0 0.0
        %620 = vmatprep.subr.mxu0 0.0
        %621 = vmatpush2.msra.mxu0 0.0
        %622 = vmatprep.subr.mxu0 0.0
        %623 = vmatpush2.msra.mxu0 0.0
        %624 = vmatprep.subr.mxu0 0.0
        %625 = vmatpush2.msra.mxu0 0.0
        %626 = vmatprep.mubr.f32.mxu0 0.0
        %627 = vmatmul.mubr.f32.gmra.mxu0 %v526
        %v628 = vpop.f32.mrf.mxu0
        %v629 = vadd.f32 %v561, %v628
        %v630 = vpop.f32.mrf.mxu0
        %631 = vmatprep.mubr.f32.mxu0 0.0
        %632 = vmatmul.mubr.f32.gmra.mxu0 %v527
        %v633 = vpop.f32.mrf.mxu0
        %v634 = vadd.f32 %v561, %v633
        %v635 = vpop.f32.mrf.mxu0
        %636 = vmatprep.mubr.f32.mxu0 0.0
        %637 = vmatmul.mubr.f32.gmra.mxu0 %v528
        %v638 = vpop.f32.mrf.mxu0
        %v639 = vadd.f32 %v561, %v638
        %v640 = vpop.f32.mrf.mxu0
        %641 = vmatprep.mubr.f32.mxu0 0.0
        %642 = vmatmul.mubr.f32.gmra.mxu0 %v529
        %v643 = vpop.f32.mrf.mxu0
        %v644 = vadd.f32 %v561, %v643
        %v645 = vpop.f32.mrf.mxu0
        %646 = vmatprep.mubr.f32.mxu0 0.0
        %647 = vmatmul.mubr.f32.gmra.mxu0 %v530
        %v648 = vpop.f32.mrf.mxu0
        %v649 = vadd.f32 %v561, %v648
        %v650 = vpop.f32.mrf.mxu0
        %651 = vmatprep.mubr.f32.mxu0 0.0
        %652 = vmatmul.mubr.f32.gmra.mxu0 %v531
        %v653 = vpop.f32.mrf.mxu0
        %v654 = vadd.f32 %v561, %v653
        %v655 = vpop.f32.mrf.mxu0
        %656 = vmatprep.mubr.f32.mxu0 0.0
        %657 = vmatmul.mubr.f32.gmra.mxu0 %v532
        %v658 = vpop.f32.mrf.mxu0
        %v659 = vadd.f32 %v561, %v658
        %v660 = vpop.f32.mrf.mxu0
        %661 = vmatprep.mubr.f32.mxu0 0.0
        %662 = vmatmul.mubr.f32.gmra.mxu0 %v533
        %v663 = vpop.f32.mrf.mxu0
        %v664 = vadd.f32 %v561, %v663
        %v665 = vpop.f32.mrf.mxu0
        %666 = vmatprep.mubr.f32.mxu0 0.0
        %667 = vmatmul.mubr.f32.gmra.mxu0 %v534
        %v668 = vpop.f32.mrf.mxu0
        %v669 = vadd.f32 %v561, %v668
        %v670 = vpop.f32.mrf.mxu0
        %671 = vmatprep.mubr.f32.mxu0 0.0
        %672 = vmatmul.mubr.f32.gmra.mxu0 %v535
        %v673 = vpop.f32.mrf.mxu0
        %v674 = vadd.f32 %v561, %v673
        %v675 = vpop.f32.mrf.mxu0
        %676 = vmatprep.mubr.f32.mxu0 0.0
        %677 = vmatmul.mubr.f32.gmra.mxu0 %v536
        %v678 = vpop.f32.mrf.mxu0
        %v679 = vadd.f32 %v561, %v678
        %v680 = vpop.f32.mrf.mxu0
        %681 = vmatprep.mubr.f32.mxu0 0.0
        %682 = vmatmul.mubr.f32.gmra.mxu0 %v537
        %v683 = vpop.f32.mrf.mxu0
        %v684 = vadd.f32 %v561, %v683
        %v685 = vpop.f32.mrf.mxu0
        %686 = vmatprep.mubr.f32.mxu0 0.0
        %687 = vmatmul.mubr.f32.gmra.mxu0 %v538
        %v688 = vpop.f32.mrf.mxu0
        %v689 = vadd.f32 %v561, %v688
        %v690 = vpop.f32.mrf.mxu0
        %691 = vmatprep.mubr.f32.mxu0 0.0
        %692 = vmatmul.mubr.f32.gmra.mxu0 %v539
        %v693 = vpop.f32.mrf.mxu0
        %v694 = vadd.f32 %v561, %v693
        %v695 = vpop.f32.mrf.mxu0
        %696 = vmatprep.mubr.f32.mxu0 0.0
        %697 = vmatmul.mubr.f32.gmra.mxu0 %v540
        %v698 = vpop.f32.mrf.mxu0
        %v699 = vadd.f32 %v561, %v698
        %v700 = vpop.f32.mrf.mxu0
        %701 = vmatprep.mubr.f32.mxu0 0.0
        %702 = vmatmul.mubr.f32.gmra.mxu0 %v541
        %v703 = vpop.f32.mrf.mxu0
        %v704 = vadd.f32 %v561, %v703
        %v705 = vpop.f32.mrf.mxu0
        %706 = vmatprep.mubr.f32.mxu0 0.0
        %707 = vmatmul.mubr.f32.gmra.mxu0 %v542
        %v708 = vpop.f32.mrf.mxu0
        %v709 = vadd.f32 %v561, %v708
        %v710 = vpop.f32.mrf.mxu0
        %711 = vmatprep.mubr.f32.mxu0 0.0
        %712 = vmatmul.mubr.f32.gmra.mxu0 %v543
        %v713 = vpop.f32.mrf.mxu0
        %v714 = vadd.f32 %v561, %v713
        %v715 = vpop.f32.mrf.mxu0
        %716 = vmatprep.mubr.f32.mxu0 0.0
        %717 = vmatmul.mubr.f32.gmra.mxu0 %v544
        %v718 = vpop.f32.mrf.mxu0
        %v719 = vadd.f32 %v561, %v718
        %v720 = vpop.f32.mrf.mxu0
        %721 = vmatprep.mubr.f32.mxu0 0.0
        %722 = vmatmul.mubr.f32.gmra.mxu0 %v545
        %v723 = vpop.f32.mrf.mxu0
        %v724 = vadd.f32 %v561, %v723
        %v725 = vpop.f32.mrf.mxu0
        %726 = vmatprep.mubr.f32.mxu0 0.0
        %727 = vmatmul.mubr.f32.gmra.mxu0 %v546
        %v728 = vpop.f32.mrf.mxu0
        %v729 = vadd.f32 %v561, %v728
        %v730 = vpop.f32.mrf.mxu0
        %731 = vmatprep.mubr.f32.mxu0 0.0
        %732 = vmatmul.mubr.f32.gmra.mxu0 %v547
        %v733 = vpop.f32.mrf.mxu0
        %v734 = vadd.f32 %v561, %v733
        %v735 = vpop.f32.mrf.mxu0
        %736 = vmatprep.mubr.f32.mxu0 0.0
        %737 = vmatmul.mubr.f32.gmra.mxu0 %v548
        %v738 = vpop.f32.mrf.mxu0
        %v739 = vadd.f32 %v561, %v738
        %v740 = vpop.f32.mrf.mxu0
        %741 = vmatprep.mubr.f32.mxu0 0.0
        %742 = vmatmul.mubr.f32.gmra.mxu0 %v549
        %v743 = vpop.f32.mrf.mxu0
        %v744 = vadd.f32 %v561, %v743
        %v745 = vpop.f32.mrf.mxu0
        %746 = vmatprep.mubr.f32.mxu0 0.0
        %747 = vmatmul.mubr.f32.gmra.mxu0 %v550
        %v748 = vpop.f32.mrf.mxu0
        %v749 = vadd.f32 %v561, %v748
        %v750 = vpop.f32.mrf.mxu0
        %751 = vmatprep.mubr.f32.mxu0 0.0
        %752 = vmatmul.mubr.f32.gmra.mxu0 %v551
        %v753 = vpop.f32.mrf.mxu0
        %v754 = vadd.f32 %v561, %v753
        %v755 = vpop.f32.mrf.mxu0
        %756 = vmatprep.mubr.f32.mxu0 0.0
        %757 = vmatmul.mubr.f32.gmra.mxu0 %v552
        %v758 = vpop.f32.mrf.mxu0
        %v759 = vadd.f32 %v561, %v758
        %v760 = vpop.f32.mrf.mxu0
        %761 = vmatprep.mubr.f32.mxu0 0.0
        %762 = vmatmul.mubr.f32.gmra.mxu0 %v553
        %v763 = vpop.f32.mrf.mxu0
        %v764 = vadd.f32 %v561, %v763
        %v765 = vpop.f32.mrf.mxu0
        %766 = vmatprep.mubr.f32.mxu0 0.0
        %767 = vmatmul.mubr.f32.gmra.mxu0 %v554
        %v768 = vpop.f32.mrf.mxu0
        %v769 = vadd.f32 %v561, %v768
        %v770 = vpop.f32.mrf.mxu0
        %771 = vmatprep.mubr.f32.mxu0 0.0
        %772 = vmatmul.mubr.f32.gmra.mxu0 %v555
        %v773 = vpop.f32.mrf.mxu0
        %v774 = vadd.f32 %v561, %v773
        %v775 = vpop.f32.mrf.mxu0
        %776 = vmatprep.mubr.f32.mxu0 0.0
        %777 = vmatmul.mubr.f32.gmra.mxu0 %v556
        %v778 = vpop.f32.mrf.mxu0
        %v779 = vadd.f32 %v561, %v778
        %v780 = vpop.f32.mrf.mxu0
        %781 = vmatprep.mubr.f32.mxu0 0.0
        %782 = vmatmul.mubr.f32.gmra.mxu0 %v557
        %v783 = vpop.f32.mrf.mxu0
        %v784 = vadd.f32 %v561, %v783
        %v785 = vpop.f32.mrf.mxu0
        %786 = vdwg.mxu0
        %787 = vst [vmem:[%s137] sm:$0xff] %v629
        %788 = vst [vmem:[%s137 + $0x8] sm:$0xff] %v634
        %789 = vst [vmem:[%s137 + $0x10] sm:$0xff] %v639
        %790 = vst [vmem:[%s137 + $0x18] sm:$0xff] %v644
        %791 = vst [vmem:[%s137 + $0x20] sm:$0xff] %v649
        %792 = vst [vmem:[%s137 + $0x28] sm:$0xff] %v654
        %793 = vst [vmem:[%s137 + $0x30] sm:$0xff] %v659
        %794 = vst [vmem:[%s137 + $0x38] sm:$0xff] %v664
        %795 = vst [vmem:[%s137 + $0x40] sm:$0xff] %v669
        %796 = vst [vmem:[%s137 + $0x48] sm:$0xff] %v674
        %797 = vst [vmem:[%s137 + $0x50] sm:$0xff] %v679
        %798 = vst [vmem:[%s137 + $0x58] sm:$0xff] %v684
        %799 = vst [vmem:[%s137 + $0x60] sm:$0xff] %v689
        %800 = vst [vmem:[%s137 + $0x68] sm:$0xff] %v694
        %801 = vst [vmem:[%s137 + $0x70] sm:$0xff] %v699
        %802 = vst [vmem:[%s137 + $0x78] sm:$0xff] %v704
        %803 = vst [vmem:[%s137 + $0x80] sm:$0xff] %v709
        %804 = vst [vmem:[%s137 + $0x88] sm:$0xff] %v714
        %805 = vst [vmem:[%s137 + $0x90] sm:$0xff] %v719
        %806 = vst [vmem:[%s137 + $0x98] sm:$0xff] %v724
        %807 = vst [vmem:[%s137 + $0xa0] sm:$0xff] %v729
        %808 = vst [vmem:[%s137 + $0xa8] sm:$0xff] %v734
        %809 = vst [vmem:[%s137 + $0xb0] sm:$0xff] %v739
        %810 = vst [vmem:[%s137 + $0xb8] sm:$0xff] %v744
        %811 = vst [vmem:[%s137 + $0xc0] sm:$0xff] %v749
        %812 = vst [vmem:[%s137 + $0xc8] sm:$0xff] %v754
        %813 = vst [vmem:[%s137 + $0xd0] sm:$0xff] %v759
        %814 = vst [vmem:[%s137 + $0xd8] sm:$0xff] %v764
        %815 = vst [vmem:[%s137 + $0xe0] sm:$0xff] %v769
        %816 = vst [vmem:[%s137 + $0xe8] sm:$0xff] %v774
        %817 = vst [vmem:[%s137 + $0xf0] sm:$0xff] %v779
        %818 = vst [vmem:[%s137 + $0xf8] sm:$0xff] %v784
        %s819 = sand.u32 %s71, 1
        %s820 = scalar_lea.sflag [#allocation3], %s819
        %s821 = sand.u32 %s71, 1
        %s822 = smul.addr %s821, 256
        %s823 = scalar_lea.vmem [#allocation2], %s822
        // Predicated region
        $region29: #{tpu_custom_call.1} parent=27 // pred_check
          %p824 = pneg %p81
        $region30: #{tpu_custom_call.1} parent=27 // pred_check_branch
          %826 = sbr.rel (%p824) target = $region32
        $region31: #{tpu_custom_call.1} parent=27 // pred_region
          %s827 = smul.u32 32, %s16
          %s829 = ssub.s32 4096, 4096
          %830 = vsyncadd %s820, %s829
          %s831 = smul.addr %s827, 128
          %s832 = scalar_lea.hbm %s2, %s831
          %s833 = sshll.u32 %s823, 4
          %s834 = int_to_ptr.vmem [resolvable:$true] %s833
          %839 = dma.vmem_to_hbm [thread:$0]  %s834, 4096, %s832, %s820, 128, 128, 8
        $region32: #{tpu_custom_call.1} parent=27 // pred_fallthru
          _
      $region28: #{tpu_custom_call.1} parent=5 // pred_fallthru
        _
      %p840 = scmp.le.s32.totalorder 2, %s11
      // Predicated region
      $region33: #{tpu_custom_call.1} parent=5 // pred_check
        %p841 = pneg %p840
      $region34: #{tpu_custom_call.1} parent=5 // pred_check_branch
        %843 = sbr.rel (%p841) target = $region36
      $region35: #{tpu_custom_call.1} parent=5 // pred_region
        %s844 = ssub.s32 %s11, 2
        // Predicated region
        $region37: #{tpu_custom_call.1} parent=35 // pred_check
          %p845 = pneg %p87
        $region38: #{tpu_custom_call.1} parent=35 // pred_check_branch
          %847 = sbr.rel (%p845) target = $region40
        $region39: #{tpu_custom_call.1} parent=35 // pred_region
          %s848 = sand.u32 %s72, 1
          %s849 = scalar_lea.sflag [#allocation3], %s848
          %s850 = sand.u32 %s72, 1
          %s851 = smul.addr %s850, 256
          %s852 = scalar_lea.vmem [#allocation2], %s851
          %853 = dma.done %s849, 4096
        $region40: #{tpu_custom_call.1} parent=35 // pred_fallthru
          _
      $region36: #{tpu_custom_call.1} parent=5 // pred_fallthru
        _
    $region6: #{tpu_custom_call.1} parent=1 // loop_footer
      %s15 = sadd.s32 1, %s11
    $region7: #{tpu_custom_call.1} parent=1 // loop_footer_branch
      %10 = sbr.rel target = $region3
    $region8: #{tpu_custom_call.1} parent=1 // loop_exit
      _
    %854 = vsyncpa [#allocation3], 1
    %s855 = scalar_lea.sflag [#allocation3], 1
    %856 = vsyncpa %s855, 1

</llo_original>
